<compile_context>
chip_gen: v7x
topology: tpu7x:2x2x1
jax: 0.10.0
libtpu: 0.0.40
codegen_flags: <defaults>
</compile_context>

<pallas_src>
from functools import partial

import numpy as np
import jax
import jax.numpy as jnp
from jax.experimental import pallas as pl
from jax.experimental.pallas import tpu as pltpu


# ----------------------------- kernel ---------------------------------------


def dct_classifier_kernel(x_ref, w_ref, w1_ref, b1_ref, w2_ref, b2_ref,
                          w3_ref, b3_ref, out_ref, acc_ref, *, mul_in_x_dtype):
    """Weighted sequence reduction streamed over a sequence grid axis + MLP.

    Grid = (batch blocks ["parallel"], sequence blocks ["arbitrary"]).
    acc_ref is a (Bt, D) f32 accumulator that persists across the seq axis.
    """
    s = pl.program_id(1)

    @pl.when(s == 0)
    def _init():
        acc_ref[...] = jnp.zeros_like(acc_ref)

    x = x_ref[...]                       # (Bt, St, D) native dtype
    w = w_ref[...]                       # (Bt, St, 1) folded mask*(proj@DCT)
    if mul_in_x_dtype:
        # v6e/v7x bf16 VPU: multiply in the input dtype, upcast only for the
        # f32 reduction/accumulation.
        prod = (x * w).astype(jnp.float32)
    else:
        # v5e has no bf16 VPU (and f32 inputs land here anyway): upcast first.
        prod = x.astype(jnp.float32) * w.astype(jnp.float32)
    # VPU elementwise multiply + XLU sublane reduce; accumulate in f32.
    acc_ref[...] += jnp.sum(prod, axis=1)

    @pl.when(s == pl.num_programs(1) - 1)
    def _finalize():
        vectors = acc_ref[...]                                       # (Bt, D) f32
        h1 = jnp.maximum(
            jnp.dot(vectors, w1_ref[...], preferred_element_type=jnp.float32)
            + b1_ref[...], 0.0)
        h2 = jnp.maximum(
            jnp.dot(h1, w2_ref[...], preferred_element_type=jnp.float32)
            + b2_ref[...], 0.0)
        # Lane-dense (Bt, 128) store; real logits live in columns 0:2.
        out_ref[...] = (
            jnp.dot(h2, w3_ref[...], preferred_element_type=jnp.float32)
            + b3_ref[...])


# --------------------------- host-side helpers -------------------------------


def dct_ii_matrix(n):
    # scipy.fftpack.dct(type=2, norm=None): X_k = 2 * sum_n x_n cos(pi*k*(2n+1)/(2N))
    k = np.arange(n, dtype=np.float64)[:, None]
    m = np.arange(n, dtype=np.float64)[None, :]
    return (2.0 * np.cos(np.pi * k * (2.0 * m + 1.0) / (2.0 * n))).astype(np.float32)


def _round_up(v, m):
    return ((v + m - 1) // m) * m


def _tpu_generation():
    try:
        kind = jax.devices()[0].device_kind.lower()
    except Exception:
        kind = ""
    if "v5 lite" in kind or "v5e" in kind or "v5lite" in kind:
        return "v5e"
    if "v7" in kind:
        return "v7x"
    if "v6" in kind:
        return "v6e"
    return "other"


def _vmem_capacity_bytes(gen):
    try:
        cap = int(pltpu.get_tpu_info().vmem_capacity_bytes)
        if cap > 0:
            return cap
    except Exception:
        pass
    return (64 << 20) if gen == "v7x" else (128 << 20)


_BUFFERED_OK = None


def _supports_buffered_constants():
    """Probe once whether pipeline_mode=pl.Buffered(1) works on this install."""
    global _BUFFERED_OK
    if _BUFFERED_OK is not None:
        return _BUFFERED_OK
    try:
        def _probe(c_ref, x_ref, o_ref):
            o_ref[...] = x_ref[...] + c_ref[...]

        f = pl.pallas_call(
            _probe,
            out_shape=jax.ShapeDtypeStruct((16, 128), jnp.float32),
            grid=(2,),
            in_specs=[
                pl.BlockSpec((8, 128), lambda i: (0, 0),
                             pipeline_mode=pl.Buffered(1)),
                pl.BlockSpec((8, 128), lambda i: (i, 0)),
            ],
            out_specs=pl.BlockSpec((8, 128), lambda i: (i, 0)),
        )
        r = jax.block_until_ready(f(jnp.ones((8, 128), jnp.float32),
                                    jnp.ones((16, 128), jnp.float32)))
        _BUFFERED_OK = bool(np.allclose(np.asarray(r), 2.0))
    except Exception:
        _BUFFERED_OK = False
    return _BUFFERED_OK


# --------------------- VMEM accounting & tile selection ----------------------


def _pipelined_step_bytes(bt, st, d, x_itemsize, w_itemsize):
    """Pipelined VMEM bytes per grid step.

    Accounts for: x double buffer, the (bt, st, 1) folded-weight block — which
    is 128-LANE PADDED in VMEM (NOT tiny when D <= 128/256) — double buffered,
    and a conservative f32 upcast/product temporary of the x tile.
    """
    d_pad = _round_up(d, 128)
    return (2 * bt * st * d_pad * x_itemsize      # x, double buffered
            + 2 * bt * st * 128 * w_itemsize      # weight, lane-padded to 128
            + bt * st * d_pad * 4)                # f32 product/cast temporary


def _resident_bytes(bt, d, n_const_buffers):
    """VMEM held for the whole call: f32 MLP weights/biases (n buffers each),
    accumulator scratch, and the output double buffer."""
    d8 = _round_up(d, 8)
    const = 4 * (d8 * 256 + 8 * 256        # w1, b1
                 + 256 * 128 + 8 * 128     # w2 (padded), b2
                 + 128 * 128 + 8 * 128)    # w3 (padded), b3
    return (n_const_buffers * const
            + bt * _round_up(d, 128) * 4   # acc scratch
            + 2 * bt * 128 * 4)            # output double buffer


def _pick_tiles(batch, seq, dim, x_itemsize, w_itemsize, slab_budget_bytes,
                want_two_batch_blocks):
    """Pick (Bt, St, B_pad, S_pad) so every grid block is full and the
    pipelined slab fits the generation-aware budget."""
    b_pad = _round_up(batch, 8)

    def largest_divisor_tile(total, cap):
        t = max(8, (min(cap, total) // 8) * 8)
        while total % t != 0:
            t -= 8
        return max(t, 8)

    bt_cap = min(b_pad, 256)                    # plenty of MXU M-dim
    if want_two_batch_blocks and b_pad >= 16:
        bt_cap = min(bt_cap, b_pad // 2)        # keep both v7x TensorCores busy
    bt = largest_divisor_tile(b_pad, bt_cap)

    # If even an 8-token sequence tile busts the budget, shrink the batch tile.
    while bt > 8 and _pipelined_step_bytes(bt, 8, dim, x_itemsize,
                                           w_itemsize) > slab_budget_bytes:
        bt = largest_divisor_tile(b_pad, bt - 8)

    per_tok = _pipelined_step_bytes(bt, 1, dim, x_itemsize, w_itemsize)
    st = max(8, (slab_budget_bytes // per_tok // 8) * 8)
    st = min(st, _round_up(seq, 8))
    s_pad = _round_up(seq, st)
    return bt, st, b_pad, s_pad


# ------------------------------- forward -------------------------------------


def _forward_impl(x, attention_mask, params, return_prob, use_buffered, gen):
    B, S, D = x.shape
    N = S - 1
    wp, bp, w1, b1, w2, b2, w3, b3 = params

    mul_in_x_dtype = (gen in ("v6e", "v7x")) and (x.dtype != jnp.float32)
    weight_dtype = x.dtype if mul_in_x_dtype else jnp.float32

    # ---- exact algebraic folds (traced once under jit) ----
    # projection(Linear(S-1,1)) ∘ DCT-II ∘ drop-token-0 collapses to a length-S
    # per-position weight; the attention mask folds in per batch row.
    C = jnp.asarray(dct_ii_matrix(N))                                   # (N, N)
    w_eff = jnp.concatenate(
        [jnp.zeros((1,), jnp.float32), wp.astype(jnp.float32)[0] @ C])  # (S,)
    weight = attention_mask.astype(jnp.float32) * w_eff[None, :]
    weight = weight.astype(weight_dtype)[:, :, None]                    # (B, S, 1)

    # Fold the projection bias into the first MLP bias:
    #   (v + bp*1_D) @ W1 + b1 == v @ W1 + (b1 + bp * sum_d W1[d, :])
    b1_eff = (b1.astype(jnp.float32)
              + bp.astype(jnp.float32)[0]
              * jnp.sum(w1.astype(jnp.float32), axis=0)).reshape(1, -1)

    # Pad the MLP tail so every MXU op and the output store is lane-full (128).
    HID2, OUT_PAD = 128, 128
    w1f = w1.astype(jnp.float32)
    w2p = jnp.zeros((256, HID2), jnp.float32).at[:, :64].set(w2)
    b2p = jnp.zeros((1, HID2), jnp.float32).at[0, :64].set(b2)
    w3p = jnp.zeros((HID2, OUT_PAD), jnp.float32).at[:64, :2].set(w3)
    b3p = jnp.zeros((1, OUT_PAD), jnp.float32).at[0, :2].set(b3)

    # ---- generation-aware tiling & VMEM budgeting ----
    vmem_cap = _vmem_capacity_bytes(gen)
    # ~40 MiB pipelined slab on 128-MiB chips (v5e/v6e), ~21 MiB on v7x (64 MiB/TC)
    slab_budget = min(vmem_cap // 3, 40 << 20)
    x_it = np.dtype(x.dtype).itemsize
    w_it = np.dtype(weight_dtype).itemsize
    Bt, St, B_pad, S_pad = _pick_tiles(
        B, S, D, x_it, w_it, slab_budget,
        want_two_batch_blocks=(gen == "v7x"))

    n_const_buffers = 1 if use_buffered else 2
    est_total = (_pipelined_step_bytes(Bt, St, D, x_it, w_it)
                 + _resident_bytes(Bt, D, n_const_buffers))
    vmem_limit = int(min(vmem_cap * 3 // 4, est_total + (8 << 20)))
    vmem_limit = max(vmem_limit, 16 << 20)

    # Zero-pad batch/sequence so every grid block is full; padded tokens carry
    # zero weight and padded batch rows are sliced away after the call.
    x_p, w_p = x, weight
    if B_pad != B or S_pad != S:
        x_p = jnp.pad(x, ((0, B_pad - B), (0, S_pad - S), (0, 0)))
        w_p = jnp.pad(weight, ((0, B_pad - B), (0, S_pad - S), (0, 0)))

    def const_spec(shape):
        # Constants never change across the grid: single-buffer them when the
        # install supports it (saves VMEM that the x tile can reuse).
        if use_buffered:
            return pl.BlockSpec(shape, lambda b, s: (0, 0),
                                pipeline_mode=pl.Buffered(1))
        return pl.BlockSpec(shape, lambda b, s: (0, 0))

    grid = (B_pad // Bt, S_pad // St)
    kernel = partial(dct_classifier_kernel, mul_in_x_dtype=mul_in_x_dtype)

    out = pl.pallas_call(
        kernel,
        out_shape=jax.ShapeDtypeStruct((B_pad, OUT_PAD), jnp.float32),
        grid=grid,
        in_specs=[
            pl.BlockSpec((Bt, St, D), lambda b, s: (b, s, 0)),   # x (pipelined)
            pl.BlockSpec((Bt, St, 1), lambda b, s: (b, s, 0)),   # folded weights
            const_spec((D, 256)),                                # w1
            const_spec((1, 256)),                                # b1 (+ folded bp)
            const_spec((256, HID2)),                             # w2 (lane-padded)
            const_spec((1, HID2)),                               # b2 (lane-padded)
            const_spec((HID2, OUT_PAD)),                         # w3 (lane-padded)
            const_spec((1, OUT_PAD)),                            # b3 (lane-padded)
        ],
        out_specs=pl.BlockSpec((Bt, OUT_PAD), lambda b, s: (b, 0)),
        scratch_shapes=[pltpu.VMEM((Bt, D), jnp.float32)],       # seq accumulator
        compiler_params=pltpu.CompilerParams(
            dimension_semantics=("parallel", "arbitrary"),
            vmem_limit_bytes=vmem_limit),
    )(x_p, w_p, w1f, b1_eff, w2p, b2p, w3p, b3p)

    logits = out[:B, :2]
    if return_prob:
        return jax.nn.softmax(logits, axis=1)
    return logits


_forward_jit = jax.jit(
    _forward_impl, static_argnames=("return_prob", "use_buffered", "gen"))


def dct_classifier_forward(x, attention_mask, params, return_prob=False):
    """JIT-wrapped forward: weight fold, padding, pallas_call, slice/softmax
    all trace once per (shape, dtype, flags)."""
    gen = _tpu_generation()
    use_buffered = _supports_buffered_constants()
    return _forward_jit(x, attention_mask, params,
                        return_prob=bool(return_prob),
                        use_buffered=use_buffered, gen=gen)


# --------------------------- params & reference ------------------------------


def init_params(key, embed_dim, max_seq_len):
    """Deterministic nn.Linear-style init (uniform +/- 1/sqrt(fan_in))."""
    n = max_seq_len - 1

    def linear(k, fan_in, fan_out):
        kw, kb = jax.random.split(k)
        lim = 1.0 / np.sqrt(fan_in)
        w = jax.random.uniform(kw, (fan_in, fan_out), jnp.float32, -lim, lim)
        b = jax.random.uniform(kb, (fan_out,), jnp.float32, -lim, lim)
        return w, b

    k0, k1, k2, k3 = jax.random.split(key, 4)
    wpT, bp = linear(k0, n, 1)          # projection: Linear(max_seq_len-1, 1)
    w1, b1 = linear(k1, embed_dim, 256)
    w2, b2 = linear(k2, 256, 64)
    w3, b3 = linear(k3, 64, 2)
    wp = wpT.T                          # (1, N), like torch's weight layout
    return (wp, bp, w1, b1, w2, b2, w3, b3)


def reference_forward(x, attention_mask, params):
    """Pure-numpy reference matching the PyTorch forward semantics."""
    wp, bp, w1, b1, w2, b2, w3, b3 = [np.asarray(p, np.float32) for p in params]
    x = np.asarray(x, np.float32)
    m = np.asarray(attention_mask, np.float32)
    xm = x * m[:, :, None]                     # embeds[~mask] = 0 (in place)
    e = xm[:, 1:, :]                           # drop first token: (B, N, D)
    N = e.shape[1]
    C = dct_ii_matrix(N)
    dcts = np.einsum('kn,bnd->bkd', C, e)      # DCT-II along seq axis
    vectors = np.einsum('k,bkd->bd', wp[0], dcts) + bp[0]   # Linear(N,1) + squeeze
    h1 = np.maximum(vectors @ w1 + b1, 0.0)
    h2 = np.maximum(h1 @ w2 + b2, 0.0)
    return h2 @ w3 + b3


# ----------------------------------- main ------------------------------------


if __name__ == "__main__":
    B, S, D = 2, 8, 32        # batch, max_seq_len, embed_dim
    key = jax.random.PRNGKey(0)
    kx, kp = jax.random.split(key)

    x = jax.random.normal(kx, (B, S, D), jnp.float32)        # last_hidden_state
    lengths = jnp.array([S, 5])
    attention_mask = jnp.arange(S)[None, :] < lengths[:, None]   # (B, S) bool

    params = init_params(kp, embed_dim=D, max_seq_len=S)

    out = jax.block_until_ready(dct_classifier_forward(x, attention_mask, params))
    ref = reference_forward(x, attention_mask, params)
    assert out.shape == (B, 2), out.shape
    if not np.allclose(np.asarray(out), ref, rtol=1e-2, atol=1e-2):
        raise AssertionError(f"kernel/reference mismatch:\n{np.asarray(out)}\nvs\n{ref}")

    # softmax branch
    probs = jax.block_until_ready(
        dct_classifier_forward(x, attention_mask, params, return_prob=True))
    if not np.allclose(np.asarray(probs).sum(axis=1), 1.0, atol=1e-5):
        raise AssertionError("softmax branch does not sum to 1")

    # bf16 smoke test: exercises the bf16-multiply path on v6e/v7x and the
    # f32-upcast path elsewhere; loose tolerance for input quantization.
    out_bf16 = jax.block_until_ready(
        dct_classifier_forward(x.astype(jnp.bfloat16), attention_mask, params))
    if not np.allclose(np.asarray(out_bf16), ref, rtol=5e-2, atol=1e-1):
        raise AssertionError(
            f"bf16 path mismatch:\n{np.asarray(out_bf16)}\nvs\n{ref}")

    print("KERNEL_OK")
</pallas_src>

<mosaic_0001>
module attributes {stable_mosaic.version = 11 : i64} {
  func.func @_probe(%arg0: i32, %arg1: memref<8x128xf32, #tpu.memory_space<vmem>>, %arg2: memref<8x128xf32, #tpu.memory_space<vmem>>, %arg3: memref<8x128xf32, #tpu.memory_space<vmem>>) attributes {dimension_semantics = [#tpu.dimension_semantics<arbitrary>], iteration_bounds = array<i64: 2>, scalar_prefetch = 0 : i64, scratch_operands = 0 : i64, tpu.core_type = #tpu.core_type<tc>, window_params = [{pipeline_mode = #tpu.pipeline_mode<synchronous>, transform_indices = @transform_0, window_bounds = array<i64: 8, 128>}, {transform_indices = @transform_1, window_bounds = array<i64: 8, 128>}, {transform_indices = @transform_2, window_bounds = array<i64: 8, 128>}]} {
    %c0 = arith.constant 0 : index
    %c0_0 = arith.constant 0 : index
    %0 = vector.load %arg2[%c0, %c0_0] : memref<8x128xf32, #tpu.memory_space<vmem>>, vector<8x128xf32>
    %c0_1 = arith.constant 0 : index
    %c0_2 = arith.constant 0 : index
    %1 = vector.load %arg1[%c0_1, %c0_2] : memref<8x128xf32, #tpu.memory_space<vmem>>, vector<8x128xf32>
    %2 = arith.addf %0, %1 : vector<8x128xf32>
    %c0_3 = arith.constant 0 : index
    %c0_4 = arith.constant 0 : index
    %3 = vector.load %arg3[%c0_3, %c0_4] : memref<8x128xf32, #tpu.memory_space<vmem>>, vector<8x128xf32>
    tpu.vector_store %arg3[%c0_3, %c0_4], %2 {strides = array<i32>} : memref<8x128xf32, #tpu.memory_space<vmem>>, vector<8x128xf32>,
    return
  }
  func.func @transform_0(%arg0: i32) -> (i32, i32) {
    %c0_i32 = arith.constant 0 : i32
    %c0_i32_0 = arith.constant 0 : i32
    %c0_i32_1 = arith.constant 0 : i32
    return %c0_i32, %c0_i32_0 : i32, i32
  }
  func.func @transform_1(%arg0: i32) -> (i32, i32) {
    %c0_i32 = arith.constant 0 : i32
    %c0_i32_0 = arith.constant 0 : i32
    return %arg0, %c0_i32 : i32, i32
  }
  func.func @transform_2(%arg0: i32) -> (i32, i32) {
    %c0_i32 = arith.constant 0 : i32
    %c0_i32_0 = arith.constant 0 : i32
    return %arg0, %c0_i32 : i32, i32
  }
}

module attributes {stable_mosaic.version = 11 : i64} {
  func.func @dct_classifier_kernel(%arg0: i32, %arg1: i32, %arg2: memref<8x8x32xf32, #tpu.memory_space<vmem>>, %arg3: memref<8x8x1xf32, #tpu.memory_space<vmem>>, %arg4: memref<32x256xf32, #tpu.memory_space<vmem>>, %arg5: memref<1x256xf32, #tpu.memory_space<vmem>>, %arg6: memref<256x128xf32, #tpu.memory_space<vmem>>, %arg7: memref<1x128xf32, #tpu.memory_space<vmem>>, %arg8: memref<128x128xf32, #tpu.memory_space<vmem>>, %arg9: memref<1x128xf32, #tpu.memory_space<vmem>>, %arg10: memref<8x128xf32, #tpu.memory_space<vmem>>, %arg11: memref<8x32xf32, #tpu.memory_space<vmem>>) attributes {dimension_semantics = [#tpu.dimension_semantics<parallel>, #tpu.dimension_semantics<arbitrary>], iteration_bounds = array<i64: 1, 1>, scalar_prefetch = 0 : i64, scratch_operands = 1 : i64, tpu.core_type = #tpu.core_type<tc>, window_params = [{transform_indices = @transform_0, window_bounds = array<i64: 8, 8, 32>}, {transform_indices = @transform_1, window_bounds = array<i64: 8, 8, 1>}, {pipeline_mode = #tpu.pipeline_mode<synchronous>, transform_indices = @transform_2, window_bounds = array<i64: 32, 256>}, {pipeline_mode = #tpu.pipeline_mode<synchronous>, transform_indices = @transform_3, window_bounds = array<i64: 1, 256>}, {pipeline_mode = #tpu.pipeline_mode<synchronous>, transform_indices = @transform_4, window_bounds = array<i64: 256, 128>}, {pipeline_mode = #tpu.pipeline_mode<synchronous>, transform_indices = @transform_5, window_bounds = array<i64: 1, 128>}, {pipeline_mode = #tpu.pipeline_mode<synchronous>, transform_indices = @transform_6, window_bounds = array<i64: 128, 128>}, {pipeline_mode = #tpu.pipeline_mode<synchronous>, transform_indices = @transform_7, window_bounds = array<i64: 1, 128>}, {transform_indices = @transform_8, window_bounds = array<i64: 8, 128>}]} {
    %c0_i32 = arith.constant 0 : i32
    %0 = arith.cmpi eq, %arg1, %c0_i32 : i32
    %1 = arith.extui %0 : i1 to i32
    %c0_i32_0 = arith.constant 0 : i32
    %2 = arith.cmpi ne, %1, %c0_i32_0 : i32
    scf.if %2 {
      %cst_12 = arith.constant 0.000000e+00 : f32
      %14 = vector.broadcast %cst_12 : f32 to vector<8x32xf32>
      %c0_13 = arith.constant 0 : index
      %c0_14 = arith.constant 0 : index
      %15 = vector.load %arg11[%c0_13, %c0_14] : memref<8x32xf32, #tpu.memory_space<vmem>>, vector<8x32xf32>
      tpu.vector_store %arg11[%c0_13, %c0_14], %14 {strides = array<i32>} : memref<8x32xf32, #tpu.memory_space<vmem>>, vector<8x32xf32>,
    } else {
    }
    %c0 = arith.constant 0 : index
    %c0_1 = arith.constant 0 : index
    %c0_2 = arith.constant 0 : index
    %3 = vector.load %arg2[%c0, %c0_1, %c0_2] : memref<8x8x32xf32, #tpu.memory_space<vmem>>, vector<8x8x32xf32>
    %c0_3 = arith.constant 0 : index
    %c0_4 = arith.constant 0 : index
    %c0_5 = arith.constant 0 : index
    %4 = vector.load %arg3[%c0_3, %c0_4, %c0_5] : memref<8x8x1xf32, #tpu.memory_space<vmem>>, vector<8x8x1xf32>
    %5 = vector.broadcast %4 : vector<8x8x1xf32> to vector<8x8x32xf32>
    %6 = arith.mulf %3, %5 : vector<8x8x32xf32>
    %c0_6 = arith.constant 0 : index
    %c0_7 = arith.constant 0 : index
    %7 = vector.load %arg11[%c0_6, %c0_7] : memref<8x32xf32, #tpu.memory_space<vmem>>, vector<8x32xf32>
    %cst = arith.constant dense<0.000000e+00> : vector<8x32xf32>
    %8 = vector.multi_reduction <add>, %6, %cst [1] : vector<8x8x32xf32> to vector<8x32xf32>
    %9 = arith.addf %7, %8 : vector<8x32xf32>
    %c0_8 = arith.constant 0 : index
    %c0_9 = arith.constant 0 : index
    %10 = vector.load %arg11[%c0_8, %c0_9] : memref<8x32xf32, #tpu.memory_space<vmem>>, vector<8x32xf32>
    tpu.vector_store %arg11[%c0_8, %c0_9], %9 {strides = array<i32>} : memref<8x32xf32, #tpu.memory_space<vmem>>, vector<8x32xf32>,
    %c0_i32_10 = arith.constant 0 : i32
    %11 = arith.cmpi eq, %arg1, %c0_i32_10 : i32
    %12 = arith.extui %11 : i1 to i32
    %c0_i32_11 = arith.constant 0 : i32
    %13 = arith.cmpi ne, %12, %c0_i32_11 : i32
    scf.if %13 {
      %c0_12 = arith.constant 0 : index
      %c0_13 = arith.constant 0 : index
      %14 = vector.load %arg11[%c0_12, %c0_13] : memref<8x32xf32, #tpu.memory_space<vmem>>, vector<8x32xf32>
      %c0_14 = arith.constant 0 : index
      %c0_15 = arith.constant 0 : index
      %15 = vector.load %arg4[%c0_14, %c0_15] : memref<32x256xf32, #tpu.memory_space<vmem>>, vector<32x256xf32>
      %cst_16 = arith.constant dense<0.000000e+00> : vector<8x256xf32>
      %16 = tpu.matmul %14, %15, %cst_16 {dimension_numbers = #tpu.dot_dimension_numbers<[1], [0], [0], [1], [0, 0, 1, 1], [], []>} : vector<8x32xf32>, vector<32x256xf32>, vector<8x256xf32> -> vector<8x256xf32>
      %c0_17 = arith.constant 0 : index
      %c0_18 = arith.constant 0 : index
      %17 = vector.load %arg5[%c0_17, %c0_18] : memref<1x256xf32, #tpu.memory_space<vmem>>, vector<1x256xf32>
      %18 = vector.broadcast %17 : vector<1x256xf32> to vector<8x256xf32>
      %19 = arith.addf %16, %18 : vector<8x256xf32>
      %cst_19 = arith.constant 0.000000e+00 : f32
      %20 = vector.broadcast %cst_19 : f32 to vector<8x256xf32>
      %21 = arith.maximumf %19, %20 : vector<8x256xf32>
      %c0_20 = arith.constant 0 : index
      %c0_21 = arith.constant 0 : index
      %22 = vector.load %arg6[%c0_20, %c0_21] : memref<256x128xf32, #tpu.memory_space<vmem>>, vector<256x128xf32>
      %cst_22 = arith.constant dense<0.000000e+00> : vector<8x128xf32>
      %23 = tpu.matmul %21, %22, %cst_22 {dimension_numbers = #tpu.dot_dimension_numbers<[1], [0], [0], [1], [0, 0, 1, 1], [], []>} : vector<8x256xf32>, vector<256x128xf32>, vector<8x128xf32> -> vector<8x128xf32>
      %c0_23 = arith.constant 0 : index
      %c0_24 = arith.constant 0 : index
      %24 = vector.load %arg7[%c0_23, %c0_24] : memref<1x128xf32, #tpu.memory_space<vmem>>, vector<1x128xf32>
      %25 = vector.broadcast %24 : vector<1x128xf32> to vector<8x128xf32>
      %26 = arith.addf %23, %25 : vector<8x128xf32>
      %cst_25 = arith.constant 0.000000e+00 : f32
      %27 = vector.broadcast %cst_25 : f32 to vector<8x128xf32>
      %28 = arith.maximumf %26, %27 : vector<8x128xf32>
      %c0_26 = arith.constant 0 : index
      %c0_27 = arith.constant 0 : index
      %29 = vector.load %arg8[%c0_26, %c0_27] : memref<128x128xf32, #tpu.memory_space<vmem>>, vector<128x128xf32>
      %cst_28 = arith.constant dense<0.000000e+00> : vector<8x128xf32>
      %30 = tpu.matmul %28, %29, %cst_28 {dimension_numbers = #tpu.dot_dimension_numbers<[1], [0], [0], [1], [0, 0, 1, 1], [], []>} : vector<8x128xf32>, vector<128x128xf32>, vector<8x128xf32> -> vector<8x128xf32>
      %c0_29 = arith.constant 0 : index
      %c0_30 = arith.constant 0 : index
      %31 = vector.load %arg9[%c0_29, %c0_30] : memref<1x128xf32, #tpu.memory_space<vmem>>, vector<1x128xf32>
      %32 = vector.broadcast %31 : vector<1x128xf32> to vector<8x128xf32>
      %33 = arith.addf %30, %32 : vector<8x128xf32>
      %c0_31 = arith.constant 0 : index
      %c0_32 = arith.constant 0 : index
      %34 = vector.load %arg10[%c0_31, %c0_32] : memref<8x128xf32, #tpu.memory_space<vmem>>, vector<8x128xf32>
      tpu.vector_store %arg10[%c0_31, %c0_32], %33 {strides = array<i32>} : memref<8x128xf32, #tpu.memory_space<vmem>>, vector<8x128xf32>,
    } else {
    }
    return
  }
  func.func @transform_0(%arg0: i32, %arg1: i32) -> (i32, i32, i32) {
    %c0_i32 = arith.constant 0 : i32
    %c0_i32_0 = arith.constant 0 : i32
    return %arg0, %arg1, %c0_i32 : i32, i32, i32
  }
  func.func @transform_1(%arg0: i32, %arg1: i32) -> (i32, i32, i32) {
    %c0_i32 = arith.constant 0 : i32
    %c0_i32_0 = arith.constant 0 : i32
    return %arg0, %arg1, %c0_i32 : i32, i32, i32
  }
  func.func @transform_2(%arg0: i32, %arg1: i32) -> (i32, i32) {
    %c0_i32 = arith.constant 0 : i32
    %c0_i32_0 = arith.constant 0 : i32
    %c0_i32_1 = arith.constant 0 : i32
    return %c0_i32, %c0_i32_0 : i32, i32
  }
  func.func @transform_3(%arg0: i32, %arg1: i32) -> (i32, i32) {
    %c0_i32 = arith.constant 0 : i32
    %c0_i32_0 = arith.constant 0 : i32
    %c0_i32_1 = arith.constant 0 : i32
    return %c0_i32, %c0_i32_0 : i32, i32
  }
  func.func @transform_4(%arg0: i32, %arg1: i32) -> (i32, i32) {
    %c0_i32 = arith.constant 0 : i32
    %c0_i32_0 = arith.constant 0 : i32
    %c0_i32_1 = arith.constant 0 : i32
    return %c0_i32, %c0_i32_0 : i32, i32
  }
  func.func @transform_5(%arg0: i32, %arg1: i32) -> (i32, i32) {
    %c0_i32 = arith.constant 0 : i32
    %c0_i32_0 = arith.constant 0 : i32
    %c0_i32_1 = arith.constant 0 : i32
    return %c0_i32, %c0_i32_0 : i32, i32
  }
  func.func @transform_6(%arg0: i32, %arg1: i32) -> (i32, i32) {
    %c0_i32 = arith.constant 0 : i32
    %c0_i32_0 = arith.constant 0 : i32
    %c0_i32_1 = arith.constant 0 : i32
    return %c0_i32, %c0_i32_0 : i32, i32
  }
  func.func @transform_7(%arg0: i32, %arg1: i32) -> (i32, i32) {
    %c0_i32 = arith.constant 0 : i32
    %c0_i32_0 = arith.constant 0 : i32
    %c0_i32_1 = arith.constant 0 : i32
    return %c0_i32, %c0_i32_0 : i32, i32
  }
  func.func @transform_8(%arg0: i32, %arg1: i32) -> (i32, i32) {
    %c0_i32 = arith.constant 0 : i32
    %c0_i32_0 = arith.constant 0 : i32
    return %arg0, %c0_i32 : i32, i32
  }
}

</mosaic_0001>

<llo_original>
// kernel: tpu_custom_call.1
$region0: #{tpu_custom_call.1}
  #allocation0 [shape = 'u32[]', space=smem, size = 0x4, offset = 0x4, fixed_abs, tag = 'smem constant byte address 0x4 - core index']
  #allocation1 [shape = 'u32[144,128]{1,0:T(1,128)}', space=vmem, size = 0x12000, scoped, tag = 'internal scratch']
  %s0 = inlined_call_operand.hbm [shape: f32[8,128], index: 0, kind: input, shape index: {}]
  %s1 = inlined_call_operand.hbm [shape: f32[16,128], index: 1, kind: input, shape index: {}]
  %s2 = inlined_call_operand.hbm [shape: f32[16,128], index: 2, kind: output, shape index: {}]
  %s3 = sld [smem:[#allocation0]]
  $region49: #{tpu_custom_call.1} parent=0
    _
  %s5 = ssub.s32 1, %s3
  %s6 = scalar_select 0, %s5, %s3
  $region1: #{tpu_custom_call.1} parent=0
    #allocation2 [shape = 'u8[4096]{0}', space=vmem, size = 0x1000, scoped, tag = 'input window, operand 0, single buffered']
    #allocation3 [shape = 's32[2]{0}', space=sflag, size = 0x8, scoped, tag = 'scoped memory for tpu_custom_call.1']
    #allocation4 [shape = 's32[2]{0}', space=sflag, size = 0x8, scoped, tag = 'scoped memory for tpu_custom_call.1']
    #allocation5 [shape = 'u8[8192]{0}', space=vmem, size = 0x2000, scoped, tag = 'input window, operand 1']
    #allocation6 [shape = 's32[2]{0}', space=sflag, size = 0x8, scoped, tag = 'scoped memory for tpu_custom_call.1']
    #allocation7 [shape = 'u8[8192]{0}', space=vmem, size = 0x2000, scoped, tag = 'output window, operand 0']
    %7 = vsyncpa [#allocation3], 0
    %8 = vsyncpa [#allocation6], 0
    %s9 = scalar_lea.sflag [#allocation6], 1
    %10 = vsyncpa %s9, 0
    %11 = vsyncpa [#allocation4], 0
    %s12 = scalar_lea.sflag [#allocation4], 1
    %13 = vsyncpa %s12, 0
    loop: start=0, step=1, limit=4
    $region2: #{tpu_custom_call.1} parent=1 // loop_pre_header
      _
    $region3: #{tpu_custom_call.1} parent=1 // loop_header
      %s15 = sphi 0, %s19
      %p16 = scmp.ge.s32.totalorder %s15, 4
      %s23 = sphi 0, %s23
      %s25 = sphi 0, %s23
      %s26 = sphi 0, %s25
      %s40 = sphi 0, %s26
      %s46 = sphi 0, %s48
      %s49 = sphi 0, %s46
      %s50 = sphi 0, %s49
      %s66 = sphi 0, %s50
      %s72 = sphi 0, %s74
      %s75 = sphi 0, %s72
      %s76 = sphi 0, %s75
      %s92 = sphi 0, %s76
    $region4: #{tpu_custom_call.1} parent=1 // loop_header_branch
      %18 = sbr.rel (%p16) target = $region8
    $region5: #{tpu_custom_call.1} parent=1 // loop_body
      %s20 = ssub.s32 %s15, 1
      %s21 = ssub.s32 %s15, 2
      %s22 = sadd.s32 %s15, 1
      %s24 = sadd.s32 %s23, 1
      %p27 = scmp.eq.s32.totalorder %s15, 1
      %p28 = scmp.ne.s32.totalorder %s23, %s25
      %p29 = scmp.eq.s32.totalorder %s15, 0
      %p30 = por %p28, %p29
      %p31 = scmp.ne.s32.totalorder %s23, %s25
      %p32 = scmp.eq.s32.totalorder %s20, 1
      %p33 = por %p31, %p32
      %p34 = scmp.ne.s32.totalorder %s25, %s26
      %p35 = scmp.eq.s32.totalorder %s20, 0
      %p36 = por %p34, %p35
      %p37 = scmp.ne.s32.totalorder %s25, %s26
      %p38 = scmp.eq.s32.totalorder %s21, 1
      %p39 = por %p37, %p38
      %p41 = scmp.ne.s32.totalorder %s26, %s40
      %p42 = scmp.eq.s32.totalorder %s21, 0
      %p43 = por %p41, %p42
      %s44 = ssub.s32 %s15, %s22
      %p45 = scmp.eq.s32.totalorder %s44, 0
      %s47 = sadd.s32 %s46, 1
      %s48 = scalar_select %p45, %s46, %s47
      %p51 = pneg %p45
      %p52 = scmp.eq.s32.totalorder %s15, 1
      %p53 = por %p51, %p52
      %p54 = scmp.ne.s32.totalorder %s46, %s49
      %p55 = scmp.eq.s32.totalorder %s15, 0
      %p56 = por %p54, %p55
      %p57 = scmp.ne.s32.totalorder %s46, %s49
      %p58 = scmp.eq.s32.totalorder %s20, 1
      %p59 = por %p57, %p58
      %p60 = scmp.ne.s32.totalorder %s49, %s50
      %p61 = scmp.eq.s32.totalorder %s20, 0
      %p62 = por %p60, %p61
      %p63 = scmp.ne.s32.totalorder %s49, %s50
      %p64 = scmp.eq.s32.totalorder %s21, 1
      %p65 = por %p63, %p64
      %p67 = scmp.ne.s32.totalorder %s50, %s66
      %p68 = scmp.eq.s32.totalorder %s21, 0
      %p69 = por %p67, %p68
      %s70 = ssub.s32 %s15, %s22
      %p71 = scmp.eq.s32.totalorder %s70, 0
      %s73 = sadd.s32 %s72, 1
      %s74 = scalar_select %p71, %s72, %s73
      %p77 = pneg %p71
      %p78 = scmp.eq.s32.totalorder %s15, 1
      %p79 = por %p77, %p78
      %p80 = scmp.ne.s32.totalorder %s72, %s75
      %p81 = scmp.eq.s32.totalorder %s15, 0
      %p82 = por %p80, %p81
      %p83 = scmp.ne.s32.totalorder %s72, %s75
      %p84 = scmp.eq.s32.totalorder %s20, 1
      %p85 = por %p83, %p84
      %p86 = scmp.ne.s32.totalorder %s75, %s76
      %p87 = scmp.eq.s32.totalorder %s20, 0
      %p88 = por %p86, %p87
      %p89 = scmp.ne.s32.totalorder %s75, %s76
      %p90 = scmp.eq.s32.totalorder %s21, 1
      %p91 = por %p89, %p90
      %p93 = scmp.ne.s32.totalorder %s76, %s92
      %p94 = scmp.eq.s32.totalorder %s21, 0
      %p95 = por %p93, %p94
      %p96 = scmp.le.s32.totalorder 1, %s15
      %p97 = scmp.lt.s32.totalorder %s15, 3
      %p98 = pnand %p96, %p97
      %p99 = pneg %p98
      // Predicated region
      $region9: #{tpu_custom_call.1} parent=5 // pred_check
        _
      $region10: #{tpu_custom_call.1} parent=5 // pred_check_branch
        %101 = sbr.rel (%p98) target = $region12
      $region11: #{tpu_custom_call.1} parent=5 // pred_region
        %s102 = ssub.s32 %s15, 1
        // Predicated region
        $region13: #{tpu_custom_call.1} parent=11 // pred_check
          %p103 = pneg %p36
        $region14: #{tpu_custom_call.1} parent=11 // pred_check_branch
          %105 = sbr.rel (%p103) target = $region16
        $region15: #{tpu_custom_call.1} parent=11 // pred_region
          %s107 = ssub.s32 128, 128
          %108 = vsyncadd [#allocation3], %s107
          %s110 = sshll.u32 [#allocation2], 4
          %s111 = int_to_ptr.vmem [resolvable:$true] %s110
          %113 = dma.hbm_to_vmem [thread:$0]  %s0, 128, %s111, [#allocation3]
        $region16: #{tpu_custom_call.1} parent=11 // pred_fallthru
          _
      $region12: #{tpu_custom_call.1} parent=5 // pred_fallthru
        _
      %p114 = scmp.lt.s32.totalorder %s15, 2
      // Predicated region
      $region17: #{tpu_custom_call.1} parent=5 // pred_check
        %p115 = pneg %p114
      $region18: #{tpu_custom_call.1} parent=5 // pred_check_branch
        %117 = sbr.rel (%p115) target = $region20
      $region19: #{tpu_custom_call.1} parent=5 // pred_region
        // Predicated region
        $region21: #{tpu_custom_call.1} parent=19 // pred_check
          %p118 = pneg %p56
        $region22: #{tpu_custom_call.1} parent=19 // pred_check_branch
          %120 = sbr.rel (%p118) target = $region24
        $region23: #{tpu_custom_call.1} parent=19 // pred_region
          %s121 = sand.u32 %s46, 1
          %s122 = scalar_lea.sflag [#allocation6], %s121
          %s123 = sand.u32 %s46, 1
          %s124 = smul.addr %s123, 8
          %s125 = scalar_lea.vmem [#allocation5], %s124
          %s127 = ssub.s32 128, 128
          %128 = vsyncadd %s122, %s127
          %s129 = smul.addr %s15, 128
          %s130 = scalar_lea.hbm %s1, %s129
          %s132 = sshll.u32 %s125, 4
          %s133 = int_to_ptr.vmem [resolvable:$true] %s132
          %135 = dma.hbm_to_vmem [thread:$0]  %s130, 128, %s133, %s122
        $region24: #{tpu_custom_call.1} parent=19 // pred_fallthru
          _
      $region20: #{tpu_custom_call.1} parent=5 // pred_fallthru
        _
      %p136 = scmp.le.s32.totalorder 1, %s15
      %p137 = scmp.lt.s32.totalorder %s15, 3
      %p138 = pnand %p136, %p137
      %p139 = pneg %p138
      // Predicated region
      $region25: #{tpu_custom_call.1} parent=5 // pred_check
        _
      $region26: #{tpu_custom_call.1} parent=5 // pred_check_branch
        %141 = sbr.rel (%p138) target = $region28
      $region27: #{tpu_custom_call.1} parent=5 // pred_region
        %s142 = ssub.s32 %s15, 1
        // Predicated region
        $region29: #{tpu_custom_call.1} parent=27 // pred_check
          %p143 = pneg %p36
        $region30: #{tpu_custom_call.1} parent=27 // pred_check_branch
          %145 = sbr.rel (%p143) target = $region32
        $region31: #{tpu_custom_call.1} parent=27 // pred_region
          %146 = dma.done [#allocation3], 128
        $region32: #{tpu_custom_call.1} parent=27 // pred_fallthru
          _
        %s147 = sand.u32 %s49, 1
        %s148 = scalar_lea.sflag [#allocation6], %s147
        %s149 = sand.u32 %s49, 1
        %s150 = smul.addr %s149, 8
        %s151 = scalar_lea.vmem [#allocation5], %s150
        // Predicated region
        $region33: #{tpu_custom_call.1} parent=27 // pred_check
          %p152 = pneg %p62
        $region34: #{tpu_custom_call.1} parent=27 // pred_check_branch
          %154 = sbr.rel (%p152) target = $region36
        $region35: #{tpu_custom_call.1} parent=27 // pred_region
          %155 = dma.done %s148, 128
        $region36: #{tpu_custom_call.1} parent=27 // pred_fallthru
          _
        %p156 = pneg %p36
        %p157 = pneg %p33
        %s158 = sand.u32 %s49, 1
        %s159 = scalar_lea.sflag [#allocation6], %s158
        %s160 = sand.u32 %s49, 1
        %s161 = smul.addr %s160, 8
        %s162 = scalar_lea.vmem [#allocation5], %s161
        %p163 = pneg %p62
        %p164 = pneg %p59
        %p165 = pneg %p88
        %p166 = pneg %p85
        %s167 = sand.u32 %s75, 1
        %s168 = scalar_lea.sflag [#allocation4], %s167
        %s169 = sand.u32 %s75, 1
        %s170 = smul.addr %s169, 8
        %s171 = scalar_lea.vmem [#allocation7], %s170
        %v172 = vld [vmem:[%s151] sm:$0xff]
        %v173 = vld [vmem:[#allocation2] sm:$0xff]
        %v174 = vadd.f32 %v172, %v173
        %175 = vst [vmem:[%s171] sm:$0xff] %v174
        %s176 = sand.u32 %s75, 1
        %s177 = scalar_lea.sflag [#allocation4], %s176
        %s178 = sand.u32 %s75, 1
        %s179 = smul.addr %s178, 8
        %s180 = scalar_lea.vmem [#allocation7], %s179
        // Predicated region
        $region37: #{tpu_custom_call.1} parent=27 // pred_check
          %p181 = pneg %p85
        $region38: #{tpu_custom_call.1} parent=27 // pred_check_branch
          %183 = sbr.rel (%p181) target = $region40
        $region39: #{tpu_custom_call.1} parent=27 // pred_region
          %s185 = ssub.s32 128, 128
          %186 = vsyncadd %s177, %s185
          %s187 = smul.addr %s20, 128
          %s188 = scalar_lea.hbm %s2, %s187
          %s190 = sshll.u32 %s180, 4
          %s191 = int_to_ptr.vmem [resolvable:$true] %s190
          %193 = dma.vmem_to_hbm [thread:$0]  %s191, 128, %s188, %s177
        $region40: #{tpu_custom_call.1} parent=27 // pred_fallthru
          _
      $region28: #{tpu_custom_call.1} parent=5 // pred_fallthru
        _
      %p194 = scmp.le.s32.totalorder 2, %s15
      // Predicated region
      $region41: #{tpu_custom_call.1} parent=5 // pred_check
        %p195 = pneg %p194
      $region42: #{tpu_custom_call.1} parent=5 // pred_check_branch
        %197 = sbr.rel (%p195) target = $region44
      $region43: #{tpu_custom_call.1} parent=5 // pred_region
        %s198 = ssub.s32 %s15, 2
        // Predicated region
        $region45: #{tpu_custom_call.1} parent=43 // pred_check
          %p199 = pneg %p91
        $region46: #{tpu_custom_call.1} parent=43 // pred_check_branch
          %201 = sbr.rel (%p199) target = $region48
        $region47: #{tpu_custom_call.1} parent=43 // pred_region
          %s202 = sand.u32 %s76, 1
          %s203 = scalar_lea.sflag [#allocation4], %s202
          %s204 = sand.u32 %s76, 1
          %s205 = smul.addr %s204, 8
          %s206 = scalar_lea.vmem [#allocation7], %s205
          %207 = dma.done %s203, 128
        $region48: #{tpu_custom_call.1} parent=43 // pred_fallthru
          _
      $region44: #{tpu_custom_call.1} parent=5 // pred_fallthru
        _
    $region6: #{tpu_custom_call.1} parent=1 // loop_footer
      %s19 = sadd.s32 1, %s15
    $region7: #{tpu_custom_call.1} parent=1 // loop_footer_branch
      %14 = sbr.rel target = $region3
    $region8: #{tpu_custom_call.1} parent=1 // loop_exit
      _
    %208 = vsyncpa [#allocation3], 1
    %s209 = scalar_lea.sflag [#allocation3], 1
    %210 = vsyncpa %s209, 1
    %211 = vsyncpa [#allocation6], 1
    %s212 = scalar_lea.sflag [#allocation6], 1
    %213 = vsyncpa %s212, 1
    %214 = vsyncpa [#allocation4], 1
    %s215 = scalar_lea.sflag [#allocation4], 1
    %216 = vsyncpa %s215, 1

// kernel: _forward_impl.1
$region0: #{_forward_impl.1}
  #allocation0 [shape = 'u32[]', space=smem, size = 0x4, offset = 0x4, fixed_abs, tag = 'smem constant byte address 0x4 - core index']
  #allocation1 [shape = 'u32[144,128]{1,0:T(1,128)}', space=vmem, size = 0x12000, scoped, tag = 'internal scratch']
  #allocation2 [shape = 'f32[8,32]{1,0:T(8,128)}', space=vmem, size = 0x1000, scoped, tag = 'scratch operand']
  %s0 = inlined_call_operand.vmem [shape: f32[8,8,32], index: 0, kind: input, shape index: {}]
  %s1 = inlined_call_operand.vmem [shape: f32[8,8,1], index: 1, kind: input, shape index: {}]
  %s2 = inlined_call_operand.vmem [shape: f32[32,256], index: 2, kind: input, shape index: {}]
  %s3 = inlined_call_operand.vmem [shape: f32[1,256], index: 3, kind: input, shape index: {}]
  %s4 = inlined_call_operand.vmem [shape: f32[256,128], index: 4, kind: input, shape index: {}]
  %s5 = inlined_call_operand.vmem [shape: f32[1,128], index: 5, kind: input, shape index: {}]
  %s6 = inlined_call_operand.vmem [shape: f32[128,128], index: 6, kind: input, shape index: {}]
  %s7 = inlined_call_operand.vmem [shape: f32[1,128], index: 7, kind: input, shape index: {}]
  %s8 = inlined_call_operand.vmem [shape: f32[8,128], index: 8, kind: output, shape index: {}]
  %s9 = sld [smem:[#allocation0]]
  $region50: #{_forward_impl.1} parent=0
    _
  %s11 = ssub.s32 1, %s9
  %s12 = scalar_select 0, %s11, %s9
  // Predicated region
  $region2: #{_forward_impl.1} parent=0 // pred_check
    _
  $region3: #{_forward_impl.1} parent=0 // pred_check_branch
    %14 = sbr.rel (0) target = $region5
  $region4: #{_forward_impl.1} parent=0 // pred_region
    _
  $region5: #{_forward_impl.1} parent=0 // pred_fallthru
    _
  // Predicated region
  $region6: #{_forward_impl.1} parent=0 // pred_check
    _
  $region7: #{_forward_impl.1} parent=0 // pred_check_branch
    %16 = sbr.rel (0) target = $region9
  $region8: #{_forward_impl.1} parent=0 // pred_region
    _
  $region9: #{_forward_impl.1} parent=0 // pred_fallthru
    _
  // Predicated region
  $region10: #{_forward_impl.1} parent=0 // pred_check
    _
  $region11: #{_forward_impl.1} parent=0 // pred_check_branch
    %18 = sbr.rel (0) target = $region13
  $region12: #{_forward_impl.1} parent=0 // pred_region
    _
  $region13: #{_forward_impl.1} parent=0 // pred_fallthru
    _
  // Predicated region
  $region14: #{_forward_impl.1} parent=0 // pred_check
    _
  $region15: #{_forward_impl.1} parent=0 // pred_check_branch
    %20 = sbr.rel (0) target = $region17
  $region16: #{_forward_impl.1} parent=0 // pred_region
    _
  $region17: #{_forward_impl.1} parent=0 // pred_fallthru
    _
  // Predicated region
  $region18: #{_forward_impl.1} parent=0 // pred_check
    _
  $region19: #{_forward_impl.1} parent=0 // pred_check_branch
    %22 = sbr.rel (0) target = $region21
  $region20: #{_forward_impl.1} parent=0 // pred_region
    _
  $region21: #{_forward_impl.1} parent=0 // pred_fallthru
    _
  // Predicated region
  $region22: #{_forward_impl.1} parent=0 // pred_check
    _
  $region23: #{_forward_impl.1} parent=0 // pred_check_branch
    %24 = sbr.rel (0) target = $region25
  $region24: #{_forward_impl.1} parent=0 // pred_region
    _
  $region25: #{_forward_impl.1} parent=0 // pred_fallthru
    _
  // Predicated region
  $region26: #{_forward_impl.1} parent=0 // pred_check
    _
  $region27: #{_forward_impl.1} parent=0 // pred_check_branch
    %26 = sbr.rel (0) target = $region29
  $region28: #{_forward_impl.1} parent=0 // pred_region
    _
  $region29: #{_forward_impl.1} parent=0 // pred_fallthru
    _
  // Predicated region
  $region30: #{_forward_impl.1} parent=0 // pred_check
    _
  $region31: #{_forward_impl.1} parent=0 // pred_check_branch
    %28 = sbr.rel (0) target = $region33
  $region32: #{_forward_impl.1} parent=0 // pred_region
    _
  $region33: #{_forward_impl.1} parent=0 // pred_fallthru
    _
  %p29 = scmp.eq.s32.totalorder 0, 0
  // Predicated region
  $region34: #{_forward_impl.1} parent=0 // pred_check
    %p30 = pneg %p29
  $region35: #{_forward_impl.1} parent=0 // pred_check_branch
    %32 = sbr.rel (%p30) target = $region37
  $region36: #{_forward_impl.1} parent=0 // pred_region
    %vm33 = vcmask 261120
    %34 = vst.msk [vmem:[#allocation2] sm:$0xff] %vm33, 0.0
  $region37: #{_forward_impl.1} parent=0 // pred_fallthru
    _
  %v35 = vld [vmem:[%s0] sm:$0xff]
  %v36 = vld [vmem:[%s0 + $0x8] sm:$0xff]
  %v37 = vld [vmem:[%s0 + $0x10] sm:$0xff]
  %v38 = vld [vmem:[%s0 + $0x18] sm:$0xff]
  %v39 = vld [vmem:[%s0 + $0x20] sm:$0xff]
  %v40 = vld [vmem:[%s0 + $0x28] sm:$0xff]
  %v41 = vld [vmem:[%s0 + $0x30] sm:$0xff]
  %v42 = vld [vmem:[%s0 + $0x38] sm:$0xff]
  %v43 = vld [vmem:[%s1] sm:$0xff]
  %v44 = vld [vmem:[%s1 + $0x8] sm:$0xff]
  %v45 = vld [vmem:[%s1 + $0x10] sm:$0xff]
  %v46 = vld [vmem:[%s1 + $0x18] sm:$0xff]
  %v47 = vld [vmem:[%s1 + $0x20] sm:$0xff]
  %v48 = vld [vmem:[%s1 + $0x28] sm:$0xff]
  %v49 = vld [vmem:[%s1 + $0x30] sm:$0xff]
  %v50 = vld [vmem:[%s1 + $0x38] sm:$0xff]
  %52 = vset.pattern.permute.xlu0 0
  %53 = vperm.xlu0 %52, %v43
  %v54 = vpop.permute.xlu0 %53
  %57 = vset.pattern.permute.xlu0 0
  %58 = vperm.xlu0 %57, %v44
  %v59 = vpop.permute.xlu0 %58
  %62 = vset.pattern.permute.xlu0 0
  %63 = vperm.xlu0 %62, %v45
  %v64 = vpop.permute.xlu0 %63
  %67 = vset.pattern.permute.xlu0 0
  %68 = vperm.xlu0 %67, %v46
  %v69 = vpop.permute.xlu0 %68
  %72 = vset.pattern.permute.xlu0 0
  %73 = vperm.xlu0 %72, %v47
  %v74 = vpop.permute.xlu0 %73
  %77 = vset.pattern.permute.xlu0 0
  %78 = vperm.xlu0 %77, %v48
  %v79 = vpop.permute.xlu0 %78
  %82 = vset.pattern.permute.xlu0 0
  %83 = vperm.xlu0 %82, %v49
  %v84 = vpop.permute.xlu0 %83
  %87 = vset.pattern.permute.xlu0 0
  %88 = vperm.xlu0 %87, %v50
  %v89 = vpop.permute.xlu0 %88
  %v91 = vmul.f32 %v35, %v54
  %v92 = vmul.f32 %v36, %v59
  %v93 = vmul.f32 %v37, %v64
  %v94 = vmul.f32 %v38, %v69
  %v95 = vmul.f32 %v39, %v74
  %v96 = vmul.f32 %v40, %v79
  %v97 = vmul.f32 %v41, %v84
  %v98 = vmul.f32 %v42, %v89
  %v99 = vld [vmem:[#allocation2] sm:$0xff]
  %vm100 = vcmask 261120
  %v101 = vsel %vm100, %v91, 0.0
  %v102 = vrot.slane %v101, 4
  %v103 = vadd.f32 %v101, %v102
  %v104 = vrot.slane %v103, 2
  %v105 = vadd.f32 %v103, %v104
  %v106 = vrot.slane %v105, 1
  %v107 = vadd.f32 %v105, %v106
  %v108 = vsel %vm100, %v92, 0.0
  %v109 = vrot.slane %v108, 4
  %v110 = vadd.f32 %v108, %v109
  %v111 = vrot.slane %v110, 2
  %v112 = vadd.f32 %v110, %v111
  %v113 = vrot.slane %v112, 1
  %v114 = vadd.f32 %v112, %v113
  %v115 = vsel %vm100, %v93, 0.0
  %v116 = vrot.slane %v115, 4
  %v117 = vadd.f32 %v115, %v116
  %v118 = vrot.slane %v117, 2
  %v119 = vadd.f32 %v117, %v118
  %v120 = vrot.slane %v119, 1
  %v121 = vadd.f32 %v119, %v120
  %v122 = vsel %vm100, %v94, 0.0
  %v123 = vrot.slane %v122, 4
  %v124 = vadd.f32 %v122, %v123
  %v125 = vrot.slane %v124, 2
  %v126 = vadd.f32 %v124, %v125
  %v127 = vrot.slane %v126, 1
  %v128 = vadd.f32 %v126, %v127
  %v129 = vsel %vm100, %v95, 0.0
  %v130 = vrot.slane %v129, 4
  %v131 = vadd.f32 %v129, %v130
  %v132 = vrot.slane %v131, 2
  %v133 = vadd.f32 %v131, %v132
  %v134 = vrot.slane %v133, 1
  %v135 = vadd.f32 %v133, %v134
  %v136 = vsel %vm100, %v96, 0.0
  %v137 = vrot.slane %v136, 4
  %v138 = vadd.f32 %v136, %v137
  %v139 = vrot.slane %v138, 2
  %v140 = vadd.f32 %v138, %v139
  %v141 = vrot.slane %v140, 1
  %v142 = vadd.f32 %v140, %v141
  %v143 = vsel %vm100, %v97, 0.0
  %v144 = vrot.slane %v143, 4
  %v145 = vadd.f32 %v143, %v144
  %v146 = vrot.slane %v145, 2
  %v147 = vadd.f32 %v145, %v146
  %v148 = vrot.slane %v147, 1
  %v149 = vadd.f32 %v147, %v148
  %v150 = vsel %vm100, %v98, 0.0
  %v151 = vrot.slane %v150, 4
  %v152 = vadd.f32 %v150, %v151
  %v153 = vrot.slane %v152, 2
  %v154 = vadd.f32 %v152, %v153
  %v155 = vrot.slane %v154, 1
  %v156 = vadd.f32 %v154, %v155
  %vm165 = vcmask 1041409
  %v166 = vsel %vm165, %v114, %v107
  %vm167 = vcmask 1042434
  %v168 = vsel %vm167, %v121, %v166
  %vm169 = vcmask 1043459
  %v170 = vsel %vm169, %v128, %v168
  %vm171 = vcmask 1044484
  %v172 = vsel %vm171, %v135, %v170
  %vm173 = vcmask 1045509
  %v174 = vsel %vm173, %v142, %v172
  %vm175 = vcmask 1046534
  %v176 = vsel %vm175, %v149, %v174
  %vm177 = vcmask 1047559
  %v178 = vsel %vm177, %v156, %v176
  %v180 = vadd.f32 %v99, %v178
  %181 = vst.msk [vmem:[#allocation2] sm:$0xff] %vm100, %v180
  // Predicated region
  $region38: #{_forward_impl.1} parent=0 // pred_check
    %p182 = pneg %p29
  $region39: #{_forward_impl.1} parent=0 // pred_check_branch
    %184 = sbr.rel (%p182) target = $region41
  $region40: #{_forward_impl.1} parent=0 // pred_region
    %v185 = vld [vmem:[#allocation2] sm:$0xff]
    %v186 = vld [vmem:[%s2] sm:$0xff]
    %v187 = vld [vmem:[%s2 + $0x8] sm:$0xff]
    %v188 = vld [vmem:[%s2 + $0x10] sm:$0xff]
    %v189 = vld [vmem:[%s2 + $0x18] sm:$0xff]
    %v190 = vld [vmem:[%s2 + $0x20] sm:$0xff]
    %v191 = vld [vmem:[%s2 + $0x28] sm:$0xff]
    %v192 = vld [vmem:[%s2 + $0x30] sm:$0xff]
    %v193 = vld [vmem:[%s2 + $0x38] sm:$0xff]
    %v194 = vld [vmem:[%s3] sm:$0x3]
    %v196 = vlaneseq
    %v197 = vshrl.u32 %v196, 7
    %v198 = vsub.s32 0, %v197
    %v199 = vrot.slane %v194, %v198
    %v200 = vlaneseq
    %v201 = vshrl.u32 %v200, 7
    %v202 = vsub.s32 1, %v201
    %v203 = vrot.slane %v194, %v202
    %v207 = vsel %vm100, %v185, 0
    %209 = vmatprep.subr.mxu0 %v187
    %210 = vmatpush1.msra.mxu0 %v186
    %211 = vmatprep.subr.mxu0 %v189
    %212 = vmatpush1.msra.mxu0 %v188
    %213 = vmatprep.subr.mxu0 %v191
    %214 = vmatpush1.msra.mxu0 %v190
    %215 = vmatprep.subr.mxu0 %v193
    %216 = vmatpush1.msra.mxu0 %v192
    %217 = vmatprep.subr.mxu0 0.0
    %218 = vmatpush1.msra.mxu0 0.0
    %219 = vmatprep.subr.mxu0 0.0
    %220 = vmatpush1.msra.mxu0 0.0
    %221 = vmatprep.subr.mxu0 0.0
    %222 = vmatpush1.msra.mxu0 0.0
    %223 = vmatprep.subr.mxu0 0.0
    %224 = vmatpush1.msra.mxu0 0.0
    %225 = vmatprep.subr.mxu0 0.0
    %226 = vmatpush1.msra.mxu0 0.0
    %227 = vmatprep.subr.mxu0 0.0
    %228 = vmatpush1.msra.mxu0 0.0
    %229 = vmatprep.subr.mxu0 0.0
    %230 = vmatpush1.msra.mxu0 0.0
    %231 = vmatprep.subr.mxu0 0.0
    %232 = vmatpush1.msra.mxu0 0.0
    %233 = vmatprep.subr.mxu0 0.0
    %234 = vmatpush1.msra.mxu0 0.0
    %235 = vmatprep.subr.mxu0 0.0
    %236 = vmatpush1.msra.mxu0 0.0
    %237 = vmatprep.subr.mxu0 0.0
    %238 = vmatpush1.msra.mxu0 0.0
    %239 = vmatprep.subr.mxu0 0.0
    %240 = vmatpush1.msra.mxu0 0.0
    %241 = vmatprep.subr.mxu0 0.0
    %242 = vmatpush1.msra.mxu0 0.0
    %243 = vmatprep.subr.mxu0 0.0
    %244 = vmatpush1.msra.mxu0 0.0
    %245 = vmatprep.subr.mxu0 0.0
    %246 = vmatpush1.msra.mxu0 0.0
    %247 = vmatprep.subr.mxu0 0.0
    %248 = vmatpush1.msra.mxu0 0.0
    %249 = vmatprep.subr.mxu0 0.0
    %250 = vmatpush1.msra.mxu0 0.0
    %251 = vmatprep.subr.mxu0 0.0
    %252 = vmatpush1.msra.mxu0 0.0
    %253 = vmatprep.subr.mxu0 0.0
    %254 = vmatpush1.msra.mxu0 0.0
    %255 = vmatprep.subr.mxu0 0.0
    %256 = vmatpush1.msra.mxu0 0.0
    %257 = vmatprep.subr.mxu0 0.0
    %258 = vmatpush1.msra.mxu0 0.0
    %259 = vmatprep.subr.mxu0 0.0
    %260 = vmatpush1.msra.mxu0 0.0
    %261 = vmatprep.subr.mxu0 0.0
    %262 = vmatpush1.msra.mxu0 0.0
    %263 = vmatprep.subr.mxu0 0.0
    %264 = vmatpush1.msra.mxu0 0.0
    %265 = vmatprep.subr.mxu0 0.0
    %266 = vmatpush1.msra.mxu0 0.0
    %267 = vmatprep.subr.mxu0 0.0
    %268 = vmatpush1.msra.mxu0 0.0
    %269 = vmatprep.subr.mxu0 0.0
    %270 = vmatpush1.msra.mxu0 0.0
    %271 = vmatprep.subr.mxu0 0.0
    %272 = vmatpush1.msra.mxu0 0.0
    %273 = vmatprep.mubr.f32.mxu0 0.0
    %274 = vmatmul.mubr.f32.gmra.mrb[0].mxu0 %v207
    %v275 = vpop.f32.mrb[0].mxu0
    %v276 = vadd.f32 %v199, %v275
    %v277 = vpop.f32.mrb[0].mxu0
    %v278 = vadd.f32 %v203, %v277
    %279 = vdwg.mxu0
    %v280 = vmax.f32 %v276, 0.0
    %v281 = vmax.f32 %v278, 0.0
    %v282 = vld [vmem:[%s4] sm:$0xff]
    %v283 = vld [vmem:[%s4 + $0x8] sm:$0xff]
    %v284 = vld [vmem:[%s4 + $0x10] sm:$0xff]
    %v285 = vld [vmem:[%s4 + $0x18] sm:$0xff]
    %v286 = vld [vmem:[%s4 + $0x20] sm:$0xff]
    %v287 = vld [vmem:[%s4 + $0x28] sm:$0xff]
    %v288 = vld [vmem:[%s4 + $0x30] sm:$0xff]
    %v289 = vld [vmem:[%s4 + $0x38] sm:$0xff]
    %v290 = vld [vmem:[%s4 + $0x40] sm:$0xff]
    %v291 = vld [vmem:[%s4 + $0x48] sm:$0xff]
    %v292 = vld [vmem:[%s4 + $0x50] sm:$0xff]
    %v293 = vld [vmem:[%s4 + $0x58] sm:$0xff]
    %v294 = vld [vmem:[%s4 + $0x60] sm:$0xff]
    %v295 = vld [vmem:[%s4 + $0x68] sm:$0xff]
    %v296 = vld [vmem:[%s4 + $0x70] sm:$0xff]
    %v297 = vld [vmem:[%s4 + $0x78] sm:$0xff]
    %v298 = vld [vmem:[%s4 + $0x80] sm:$0xff]
    %v299 = vld [vmem:[%s4 + $0x88] sm:$0xff]
    %v300 = vld [vmem:[%s4 + $0x90] sm:$0xff]
    %v301 = vld [vmem:[%s4 + $0x98] sm:$0xff]
    %v302 = vld [vmem:[%s4 + $0xa0] sm:$0xff]
    %v303 = vld [vmem:[%s4 + $0xa8] sm:$0xff]
    %v304 = vld [vmem:[%s4 + $0xb0] sm:$0xff]
    %v305 = vld [vmem:[%s4 + $0xb8] sm:$0xff]
    %v306 = vld [vmem:[%s4 + $0xc0] sm:$0xff]
    %v307 = vld [vmem:[%s4 + $0xc8] sm:$0xff]
    %v308 = vld [vmem:[%s4 + $0xd0] sm:$0xff]
    %v309 = vld [vmem:[%s4 + $0xd8] sm:$0xff]
    %v310 = vld [vmem:[%s4 + $0xe0] sm:$0xff]
    %v311 = vld [vmem:[%s4 + $0xe8] sm:$0xff]
    %v312 = vld [vmem:[%s4 + $0xf0] sm:$0xff]
    %v313 = vld [vmem:[%s4 + $0xf8] sm:$0xff]
    %v314 = vld [vmem:[%s5] sm:$0x1]
    %v316 = vlaneseq
    %v317 = vshrl.u32 %v316, 7
    %v318 = vsub.s32 0, %v317
    %v319 = vrot.slane %v314, %v318
    %321 = vmatprep.subr.mxu0 0.0
    %322 = vmatpush1.msra.mxu0 %v282
    %323 = vmatprep.subr.mxu0 0.0
    %324 = vmatpush1.msra.mxu0 %v283
    %325 = vmatprep.subr.mxu0 0.0
    %326 = vmatpush1.msra.mxu0 %v284
    %327 = vmatprep.subr.mxu0 0.0
    %328 = vmatpush1.msra.mxu0 %v285
    %329 = vmatprep.subr.mxu0 0.0
    %330 = vmatpush1.msra.mxu0 %v286
    %331 = vmatprep.subr.mxu0 0.0
    %332 = vmatpush1.msra.mxu0 %v287
    %333 = vmatprep.subr.mxu0 0.0
    %334 = vmatpush1.msra.mxu0 %v288
    %335 = vmatprep.subr.mxu0 0.0
    %336 = vmatpush1.msra.mxu0 %v289
    %337 = vmatprep.subr.mxu0 0.0
    %338 = vmatpush1.msra.mxu0 %v290
    %339 = vmatprep.subr.mxu0 0.0
    %340 = vmatpush1.msra.mxu0 %v291
    %341 = vmatprep.subr.mxu0 0.0
    %342 = vmatpush1.msra.mxu0 %v292
    %343 = vmatprep.subr.mxu0 0.0
    %344 = vmatpush1.msra.mxu0 %v293
    %345 = vmatprep.subr.mxu0 0.0
    %346 = vmatpush1.msra.mxu0 %v294
    %347 = vmatprep.subr.mxu0 0.0
    %348 = vmatpush1.msra.mxu0 %v295
    %349 = vmatprep.subr.mxu0 0.0
    %350 = vmatpush1.msra.mxu0 %v296
    %351 = vmatprep.subr.mxu0 0.0
    %352 = vmatpush1.msra.mxu0 %v297
    %353 = vmatprep.subr.mxu0 0.0
    %354 = vmatpush1.msra.mxu0 %v298
    %355 = vmatprep.subr.mxu0 0.0
    %356 = vmatpush1.msra.mxu0 %v299
    %357 = vmatprep.subr.mxu0 0.0
    %358 = vmatpush1.msra.mxu0 %v300
    %359 = vmatprep.subr.mxu0 0.0
    %360 = vmatpush1.msra.mxu0 %v301
    %361 = vmatprep.subr.mxu0 0.0
    %362 = vmatpush1.msra.mxu0 %v302
    %363 = vmatprep.subr.mxu0 0.0
    %364 = vmatpush1.msra.mxu0 %v303
    %365 = vmatprep.subr.mxu0 0.0
    %366 = vmatpush1.msra.mxu0 %v304
    %367 = vmatprep.subr.mxu0 0.0
    %368 = vmatpush1.msra.mxu0 %v305
    %369 = vmatprep.subr.mxu0 0.0
    %370 = vmatpush1.msra.mxu0 %v306
    %371 = vmatprep.subr.mxu0 0.0
    %372 = vmatpush1.msra.mxu0 %v307
    %373 = vmatprep.subr.mxu0 0.0
    %374 = vmatpush1.msra.mxu0 %v308
    %375 = vmatprep.subr.mxu0 0.0
    %376 = vmatpush1.msra.mxu0 %v309
    %377 = vmatprep.subr.mxu0 0.0
    %378 = vmatpush1.msra.mxu0 %v310
    %379 = vmatprep.subr.mxu0 0.0
    %380 = vmatpush1.msra.mxu0 %v311
    %381 = vmatprep.subr.mxu0 0.0
    %382 = vmatpush1.msra.mxu0 %v312
    %383 = vmatprep.subr.mxu0 0.0
    %384 = vmatpush1.msra.mxu0 %v313
    %385 = vmatprep.mubr.f32.mxu0 %v281
    %386 = vmatmul.mubr.f32.gmra.mrb[0].mxu0 %v280
    %v387 = vpop.f32.mrb[0].mxu0
    %v388 = vadd.f32 %v319, %v387
    %v389 = vpop.f32.mrb[0].mxu0
    %390 = vdwg.mxu0
    %v391 = vmax.f32 %v388, 0.0
    %v392 = vld [vmem:[%s6] sm:$0xff]
    %v393 = vld [vmem:[%s6 + $0x8] sm:$0xff]
    %v394 = vld [vmem:[%s6 + $0x10] sm:$0xff]
    %v395 = vld [vmem:[%s6 + $0x18] sm:$0xff]
    %v396 = vld [vmem:[%s6 + $0x20] sm:$0xff]
    %v397 = vld [vmem:[%s6 + $0x28] sm:$0xff]
    %v398 = vld [vmem:[%s6 + $0x30] sm:$0xff]
    %v399 = vld [vmem:[%s6 + $0x38] sm:$0xff]
    %v400 = vld [vmem:[%s6 + $0x40] sm:$0xff]
    %v401 = vld [vmem:[%s6 + $0x48] sm:$0xff]
    %v402 = vld [vmem:[%s6 + $0x50] sm:$0xff]
    %v403 = vld [vmem:[%s6 + $0x58] sm:$0xff]
    %v404 = vld [vmem:[%s6 + $0x60] sm:$0xff]
    %v405 = vld [vmem:[%s6 + $0x68] sm:$0xff]
    %v406 = vld [vmem:[%s6 + $0x70] sm:$0xff]
    %v407 = vld [vmem:[%s6 + $0x78] sm:$0xff]
    %v408 = vld [vmem:[%s7] sm:$0x1]
    %v410 = vlaneseq
    %v411 = vshrl.u32 %v410, 7
    %v412 = vsub.s32 0, %v411
    %v413 = vrot.slane %v408, %v412
    %415 = vmatprep.subr.mxu0 0.0
    %416 = vmatpush1.msra.mxu0 %v392
    %417 = vmatprep.subr.mxu0 0.0
    %418 = vmatpush1.msra.mxu0 %v393
    %419 = vmatprep.subr.mxu0 0.0
    %420 = vmatpush1.msra.mxu0 %v394
    %421 = vmatprep.subr.mxu0 0.0
    %422 = vmatpush1.msra.mxu0 %v395
    %423 = vmatprep.subr.mxu0 0.0
    %424 = vmatpush1.msra.mxu0 %v396
    %425 = vmatprep.subr.mxu0 0.0
    %426 = vmatpush1.msra.mxu0 %v397
    %427 = vmatprep.subr.mxu0 0.0
    %428 = vmatpush1.msra.mxu0 %v398
    %429 = vmatprep.subr.mxu0 0.0
    %430 = vmatpush1.msra.mxu0 %v399
    %431 = vmatprep.subr.mxu0 0.0
    %432 = vmatpush1.msra.mxu0 %v400
    %433 = vmatprep.subr.mxu0 0.0
    %434 = vmatpush1.msra.mxu0 %v401
    %435 = vmatprep.subr.mxu0 0.0
    %436 = vmatpush1.msra.mxu0 %v402
    %437 = vmatprep.subr.mxu0 0.0
    %438 = vmatpush1.msra.mxu0 %v403
    %439 = vmatprep.subr.mxu0 0.0
    %440 = vmatpush1.msra.mxu0 %v404
    %441 = vmatprep.subr.mxu0 0.0
    %442 = vmatpush1.msra.mxu0 %v405
    %443 = vmatprep.subr.mxu0 0.0
    %444 = vmatpush1.msra.mxu0 %v406
    %445 = vmatprep.subr.mxu0 0.0
    %446 = vmatpush1.msra.mxu0 %v407
    %447 = vmatprep.subr.mxu0 0.0
    %448 = vmatpush1.msra.mxu0 0.0
    %449 = vmatprep.subr.mxu0 0.0
    %450 = vmatpush1.msra.mxu0 0.0
    %451 = vmatprep.subr.mxu0 0.0
    %452 = vmatpush1.msra.mxu0 0.0
    %453 = vmatprep.subr.mxu0 0.0
    %454 = vmatpush1.msra.mxu0 0.0
    %455 = vmatprep.subr.mxu0 0.0
    %456 = vmatpush1.msra.mxu0 0.0
    %457 = vmatprep.subr.mxu0 0.0
    %458 = vmatpush1.msra.mxu0 0.0
    %459 = vmatprep.subr.mxu0 0.0
    %460 = vmatpush1.msra.mxu0 0.0
    %461 = vmatprep.subr.mxu0 0.0
    %462 = vmatpush1.msra.mxu0 0.0
    %463 = vmatprep.subr.mxu0 0.0
    %464 = vmatpush1.msra.mxu0 0.0
    %465 = vmatprep.subr.mxu0 0.0
    %466 = vmatpush1.msra.mxu0 0.0
    %467 = vmatprep.subr.mxu0 0.0
    %468 = vmatpush1.msra.mxu0 0.0
    %469 = vmatprep.subr.mxu0 0.0
    %470 = vmatpush1.msra.mxu0 0.0
    %471 = vmatprep.subr.mxu0 0.0
    %472 = vmatpush1.msra.mxu0 0.0
    %473 = vmatprep.subr.mxu0 0.0
    %474 = vmatpush1.msra.mxu0 0.0
    %475 = vmatprep.subr.mxu0 0.0
    %476 = vmatpush1.msra.mxu0 0.0
    %477 = vmatprep.subr.mxu0 0.0
    %478 = vmatpush1.msra.mxu0 0.0
    %479 = vmatprep.mubr.f32.mxu0 0.0
    %480 = vmatmul.mubr.f32.gmra.mrb[0].mxu0 %v391
    %v481 = vpop.f32.mrb[0].mxu0
    %v482 = vadd.f32 %v413, %v481
    %v483 = vpop.f32.mrb[0].mxu0
    %484 = vdwg.mxu0
    %485 = vst [vmem:[%s8] sm:$0xff] %v482
  $region41: #{_forward_impl.1} parent=0 // pred_fallthru
    _
  // Predicated region
  $region42: #{_forward_impl.1} parent=0 // pred_check
    _
  $region43: #{_forward_impl.1} parent=0 // pred_check_branch
    %487 = sbr.rel (0) target = $region45
  $region44: #{_forward_impl.1} parent=0 // pred_region
    _
  $region45: #{_forward_impl.1} parent=0 // pred_fallthru
    _
  // Predicated region
  $region46: #{_forward_impl.1} parent=0 // pred_check
    _
  $region47: #{_forward_impl.1} parent=0 // pred_check_branch
    %489 = sbr.rel (0) target = $region49
  $region48: #{_forward_impl.1} parent=0 // pred_region
    _
  $region49: #{_forward_impl.1} parent=0 // pred_fallthru
    _

</llo_original>
